<compile_context>
chip_gen: v5e
topology: v5e:2x2
jax: 0.10.0
libtpu: 0.0.40
codegen_flags: <defaults>
</compile_context>

<pallas_src>
import functools
import math

import jax
import jax.numpy as jnp
from jax import lax
from jax.experimental import pallas as pl
from jax.experimental.pallas import tpu as pltpu


# ----------------------------- kernels ---------------------------------------


def _row_mask(tile_rows, n_rows):
    """(tile_rows, 1) bool mask: True for rows that exist in the un-padded input."""
    row = pl.program_id(0) * tile_rows + lax.broadcasted_iota(
        jnp.int32, (tile_rows, 1), 0)
    return row < n_rows


def _lse_and_true(x, lbl):
    """Row-wise logsumexp and logit at the true class.  x: (TB, C) f32, lbl: (TB, 1) i32."""
    m = jnp.max(x, axis=-1, keepdims=True)
    lse = jnp.log(jnp.sum(jnp.exp(x - m), axis=-1, keepdims=True)) + m
    cls = lax.broadcasted_iota(jnp.int32, x.shape, 1)
    # NOTE: out-of-range labels silently select nothing (contribute 0), unlike PyTorch
    # which raises; acceptable for well-formed inputs.
    x_true = jnp.sum(jnp.where(cls == lbl, x, 0.0), axis=-1, keepdims=True)
    return lse, x_true


def _ce_rows_kernel(logits_ref, labels_ref, loss_ref, *, tile_rows, n_rows):
    """Per-row cross-entropy: lse(x) - x[label]; padded rows write 0."""
    x = logits_ref[...].astype(jnp.float32)                  # (TB, C)
    lbl = labels_ref[...]                                    # (TB, 1) int32
    lse, x_true = _lse_and_true(x, lbl)
    loss = lse - x_true
    loss_ref[...] = jnp.where(_row_mask(tile_rows, n_rows), loss, 0.0)


def _kl_rows_kernel(logits_ref, labels_ref, loss_ref, *, tile_rows, n_rows,
                    label_one, label_zero, k_const, n_classes):
    """Per-row label-smoothed KL (F.kl_div convention), algebraically simplified.

    loss_row = K + label_zero*(C*lse - sum_x) - (label_one - label_zero)*(x_true - lse)
    where K = label_one*log(label_one) + (C-1)*label_zero*log(label_zero) (0*log 0 := 0).
    """
    x = logits_ref[...].astype(jnp.float32)                  # (TB, C)
    lbl = labels_ref[...]                                    # (TB, 1) int32
    lse, x_true = _lse_and_true(x, lbl)
    sum_x = jnp.sum(x, axis=-1, keepdims=True)
    loss = (k_const
            + label_zero * (n_classes * lse - sum_x)
            - (label_one - label_zero) * (x_true - lse))
    loss_ref[...] = jnp.where(_row_mask(tile_rows, n_rows), loss, 0.0)


# ----------------------------- wrapper ----------------------------------------


def loss_forward(y_pred, y_true, *, smoothing_confidence=None, num_cls=1000,
                 tile_rows=None):
    """Pallas equivalent of Loss.forward. Returns a scalar f32 loss.

    y_pred is kept in its native dtype (e.g. bf16) on the HBM side and upcast per-tile
    inside the kernel.  y_pred is flattened to [N, C]; y_true to [N].
    """
    c = y_pred.shape[-1]
    # TODO(synk): for >2-D inputs on the plain cross-entropy path, PyTorch expects the
    # class dim at axis 1; here we always flatten to (-1, C) (matches the smoothing path
    # and the common (N, C) ViT classification case).
    logits = y_pred.reshape(-1, c)                           # native dtype, no upcast
    labels = jnp.asarray(y_true).reshape(-1, 1).astype(jnp.int32)
    n = logits.shape[0]

    if tile_rows is None:
        # ~2 MiB of f32 working set per tile; comfortably inside the scoped-VMEM default
        # on v5e/v6e/v7x even with double buffering + f32 temporaries.
        tile_rows = max(8, min(1024, (1 << 19) // max(c, 1)))
    tile_rows = max(8, (tile_rows // 8) * 8)                 # sublane multiple
    tile_rows = min(tile_rows, ((n + 7) // 8) * 8)           # don't exceed problem size

    n_tiles = pl.cdiv(n, tile_rows)
    n_pad = n_tiles * tile_rows

    # NOTE: truthiness mirrors the PyTorch module exactly: smoothing_confidence=0.0
    # (or None) selects the cross-entropy path.
    if smoothing_confidence:
        label_one = float(smoothing_confidence)
        label_zero = (1.0 - label_one) / (num_cls - 1)
        k_const = label_one * math.log(label_one)
        if label_zero > 0.0:
            k_const += (c - 1) * label_zero * math.log(label_zero)
        kernel = functools.partial(
            _kl_rows_kernel, tile_rows=tile_rows, n_rows=n,
            label_one=label_one, label_zero=label_zero,
            k_const=k_const, n_classes=float(c))
    else:
        kernel = functools.partial(_ce_rows_kernel, tile_rows=tile_rows, n_rows=n)

    row_losses = pl.pallas_call(
        kernel,
        out_shape=jax.ShapeDtypeStruct((n_pad, 1), jnp.float32),
        grid_spec=pltpu.PrefetchScalarGridSpec(
            num_scalar_prefetch=0,
            grid=(n_tiles,),
            in_specs=[
                pl.BlockSpec((tile_rows, c), lambda i: (i, 0)),   # logits tile (native dtype)
                pl.BlockSpec((tile_rows, 1), lambda i: (i, 0)),   # labels tile
            ],
            out_specs=pl.BlockSpec((tile_rows, 1), lambda i: (i, 0)),  # per-row losses
        ),
        compiler_params=pltpu.CompilerParams(
            dimension_semantics=("parallel",),                   # disjoint output blocks
            vmem_limit_bytes=32 * 1024 * 1024),
    )(logits, labels)

    # Tiny final reduction (N f32 values) + batchmean / mean divide in plain XLA.
    return jnp.sum(row_losses) / n


# --------------------------- pure-JAX reference --------------------------------


def ref_loss(y_pred, y_true, smoothing_confidence=None, num_cls=1000):
    c = y_pred.shape[-1]
    logits = y_pred.reshape(-1, c).astype(jnp.float32)
    labels = y_true.reshape(-1).astype(jnp.int32)
    logp = jax.nn.log_softmax(logits, axis=-1)
    if smoothing_confidence:
        label_one = smoothing_confidence
        label_zero = (1.0 - smoothing_confidence) / (num_cls - 1)
        target = jnp.full_like(logp, label_zero)
        target = target.at[jnp.arange(labels.shape[0]), labels].set(label_one)
        kl = jnp.where(target > 0.0, target * (jnp.log(target) - logp), 0.0)
        return jnp.sum(kl) / logits.shape[0]
    nll = -jnp.take_along_axis(logp, labels[:, None], axis=-1)
    return jnp.mean(nll)


# --------------------------------- main ----------------------------------------


if __name__ == "__main__":
    key = jax.random.PRNGKey(0)
    k1, k2 = jax.random.split(key)

    # Small shapes consistent with the module: (batch, seq, num_cls) logits + int labels.
    B, S, C = 2, 8, 128          # flattened rows N = 16, classes = num_cls = 128
    y_pred = jax.random.normal(k1, (B, S, C), dtype=jnp.float32).astype(jnp.bfloat16)
    y_true = jax.random.randint(k2, (B, S), 0, C, dtype=jnp.int32)

    # Mode 1: label smoothing (KL divergence, batchmean).
    smooth = 0.9
    out_kl = loss_forward(y_pred, y_true, smoothing_confidence=smooth, num_cls=C)
    jax.block_until_ready(out_kl)
    ref_kl = ref_loss(y_pred, y_true, smoothing_confidence=smooth, num_cls=C)
    assert jnp.allclose(out_kl, ref_kl, rtol=1e-4, atol=1e-5), (out_kl, ref_kl)

    # Mode 2: plain cross-entropy.
    out_ce = loss_forward(y_pred.reshape(-1, C), y_true.reshape(-1),
                          smoothing_confidence=None, num_cls=C)
    jax.block_until_ready(out_ce)
    ref_ce = ref_loss(y_pred, y_true, smoothing_confidence=None, num_cls=C)
    assert jnp.allclose(out_ce, ref_ce, rtol=1e-4, atol=1e-5), (out_ce, ref_ce)

    print("KERNEL_OK")
</pallas_src>

<mosaic_0001>
module attributes {stable_mosaic.version = 11 : i64} {
  func.func @_kl_rows_kernel(%arg0: i32, %arg1: memref<16x128xbf16, #tpu.memory_space<vmem>>, %arg2: memref<16x1xi32, #tpu.memory_space<vmem>>, %arg3: memref<16x1xf32, #tpu.memory_space<vmem>>) attributes {dimension_semantics = [#tpu.dimension_semantics<parallel>], iteration_bounds = array<i64: 1>, scalar_prefetch = 0 : i64, scratch_operands = 0 : i64, tpu.core_type = #tpu.core_type<tc>, window_params = [{transform_indices = @transform_0, window_bounds = array<i64: 16, 128>}, {transform_indices = @transform_1, window_bounds = array<i64: 16, 1>}, {transform_indices = @transform_2, window_bounds = array<i64: 16, 1>}]} {
    %c0 = arith.constant 0 : index
    %c0_0 = arith.constant 0 : index
    %0 = vector.load %arg1[%c0, %c0_0] : memref<16x128xbf16, #tpu.memory_space<vmem>>, vector<16x128xbf16>
    %1 = arith.extf %0 : vector<16x128xbf16> to vector<16x128xf32>
    %c0_1 = arith.constant 0 : index
    %c0_2 = arith.constant 0 : index
    %2 = vector.load %arg2[%c0_1, %c0_2] : memref<16x1xi32, #tpu.memory_space<vmem>>, vector<16x1xi32>
    %cst = arith.constant dense<0xFF800000> : vector<16xf32>
    %3 = vector.multi_reduction <maximumf>, %1, %cst [1] : vector<16x128xf32> to vector<16xf32>
    %4 = vector.shape_cast %3 : vector<16xf32> to vector<16x1xf32>
    %5 = vector.broadcast %4 : vector<16x1xf32> to vector<16x128xf32>
    %6 = arith.subf %1, %5 : vector<16x128xf32>
    %7 = math.exp %6 : vector<16x128xf32>
    %cst_3 = arith.constant dense<0.000000e+00> : vector<16xf32>
    %8 = vector.multi_reduction <add>, %7, %cst_3 [1] : vector<16x128xf32> to vector<16xf32>
    %9 = vector.shape_cast %8 : vector<16xf32> to vector<16x1xf32>
    %10 = math.log %9 : vector<16x1xf32>
    %11 = arith.addf %10, %4 : vector<16x1xf32>
    %12 = tpu.iota {dimensions = array<i32: 1>} : vector<16x128xi32>
    %13 = vector.broadcast %2 : vector<16x1xi32> to vector<16x128xi32>
    %14 = arith.cmpi eq, %12, %13 : vector<16x128xi32>
    %cst_4 = arith.constant 0.000000e+00 : f32
    %15 = vector.broadcast %cst_4 : f32 to vector<16x128xf32>
    %16 = arith.select %14, %1, %15 : vector<16x128xi1>, vector<16x128xf32>
    %cst_5 = arith.constant dense<0.000000e+00> : vector<16xf32>
    %17 = vector.multi_reduction <add>, %16, %cst_5 [1] : vector<16x128xf32> to vector<16xf32>
    %18 = vector.shape_cast %17 : vector<16xf32> to vector<16x1xf32>
    %cst_6 = arith.constant dense<0.000000e+00> : vector<16xf32>
    %19 = vector.multi_reduction <add>, %1, %cst_6 [1] : vector<16x128xf32> to vector<16xf32>
    %20 = vector.shape_cast %19 : vector<16xf32> to vector<16x1xf32>
    %cst_7 = arith.constant 1.280000e+02 : f32
    %21 = vector.broadcast %cst_7 : f32 to vector<16x1xf32>
    %22 = arith.mulf %21, %11 : vector<16x1xf32>
    %23 = arith.subf %22, %20 : vector<16x1xf32>
    %cst_8 = arith.constant 7.87401571E-4 : f32
    %24 = vector.broadcast %cst_8 : f32 to vector<16x1xf32>
    %25 = arith.mulf %24, %23 : vector<16x1xf32>
    %cst_9 = arith.constant -0.809501707 : f32
    %26 = vector.broadcast %cst_9 : f32 to vector<16x1xf32>
    %27 = arith.addf %26, %25 : vector<16x1xf32>
    %28 = arith.subf %18, %11 : vector<16x1xf32>
    %cst_10 = arith.constant 0.899212599 : f32
    %29 = vector.broadcast %cst_10 : f32 to vector<16x1xf32>
    %30 = arith.mulf %29, %28 : vector<16x1xf32>
    %31 = arith.subf %27, %30 : vector<16x1xf32>
    %c16_i32 = arith.constant 16 : i32
    %32 = arith.muli %arg0, %c16_i32 : i32
    %33 = tpu.iota {dimensions = array<i32: 0>} : vector<16x1xi32>
    %34 = vector.broadcast %32 : i32 to vector<16x1xi32>
    %35 = arith.addi %34, %33 : vector<16x1xi32>
    %c16_i32_11 = arith.constant 16 : i32
    %36 = vector.broadcast %c16_i32_11 : i32 to vector<16x1xi32>
    %37 = arith.cmpi slt, %35, %36 : vector<16x1xi32>
    %cst_12 = arith.constant 0.000000e+00 : f32
    %38 = vector.broadcast %cst_12 : f32 to vector<16x1xf32>
    %39 = arith.select %37, %31, %38 : vector<16x1xi1>, vector<16x1xf32>
    %c0_13 = arith.constant 0 : index
    %c0_14 = arith.constant 0 : index
    %40 = vector.load %arg3[%c0_13, %c0_14] : memref<16x1xf32, #tpu.memory_space<vmem>>, vector<16x1xf32>
    tpu.vector_store %arg3[%c0_13, %c0_14], %39 {strides = array<i32>} : memref<16x1xf32, #tpu.memory_space<vmem>>, vector<16x1xf32>,
    return
  }
  func.func @transform_0(%arg0: i32) -> (i32, i32) {
    %c0_i32 = arith.constant 0 : i32
    %c0_i32_0 = arith.constant 0 : i32
    return %arg0, %c0_i32 : i32, i32
  }
  func.func @transform_1(%arg0: i32) -> (i32, i32) {
    %c0_i32 = arith.constant 0 : i32
    %c0_i32_0 = arith.constant 0 : i32
    return %arg0, %c0_i32 : i32, i32
  }
  func.func @transform_2(%arg0: i32) -> (i32, i32) {
    %c0_i32 = arith.constant 0 : i32
    %c0_i32_0 = arith.constant 0 : i32
    return %arg0, %c0_i32 : i32, i32
  }
}

</mosaic_0001>

<llo_original>
// kernel: tpu_custom_call.1
$region0: #{tpu_custom_call.1}
  #allocation0 [shape = 'u32[]', space=smem, size = 0x4, offset = 0x4, fixed_abs, tag = 'smem constant byte address 0x4 - core index']
  #allocation1 [shape = 'u32[72,128]{1,0:T(1,128)}', space=vmem, size = 0x9000, scoped, tag = 'internal scratch']
  %s0 = inlined_call_operand.vmem [shape: bf16[16,128], index: 0, kind: input, shape index: {}]
  %s1 = inlined_call_operand.vmem [shape: s32[16,1], index: 1, kind: input, shape index: {}]
  %s2 = inlined_call_operand.vmem [shape: f32[16,1], index: 2, kind: output, shape index: {}]
  %s3 = sld [smem:[#allocation0]]
  $region18: #{tpu_custom_call.1} parent=0
    _
  %s5 = ssub.s32 1, %s3
  %s6 = scalar_select 0, %s5, %s3
  // Predicated region
  $region2: #{tpu_custom_call.1} parent=0 // pred_check
    _
  $region3: #{tpu_custom_call.1} parent=0 // pred_check_branch
    %8 = sbr.rel (0) target = $region5
  $region4: #{tpu_custom_call.1} parent=0 // pred_region
    _
  $region5: #{tpu_custom_call.1} parent=0 // pred_fallthru
    _
  // Predicated region
  $region6: #{tpu_custom_call.1} parent=0 // pred_check
    _
  $region7: #{tpu_custom_call.1} parent=0 // pred_check_branch
    %10 = sbr.rel (0) target = $region9
  $region8: #{tpu_custom_call.1} parent=0 // pred_region
    _
  $region9: #{tpu_custom_call.1} parent=0 // pred_fallthru
    _
  %v11 = vld [vmem:[%s0] sm:$0xf]
  %v12 = vld [vmem:[%s0 + $0x4] sm:$0xf]
  %v13 = vunpack.c.l.bf16 %v11
  %v14 = vunpack.c.l.bf16 %v12
  %v15 = vld [vmem:[%s1] sm:$0xff]
  %v16 = vld [vmem:[%s1 + $0x8] sm:$0xff]
  %17 = vmax.xlane.f32.xlu0 %v13
  %v18 = vpop.xlane.xlu0 %17
  %19 = vmax.xlane.f32.xlu0 %v14
  %v20 = vpop.xlane.xlu0 %19
  %v21 = vsub.f32 %v13, %v18
  %v22 = vsub.f32 %v14, %v20
  %v23 = vmul.f32 %v21, 1.442695
  %v24 = vpow.pop %v23
  %v25 = vmul.f32 %v22, 1.442695
  %v26 = vpow.pop %v25
  %27 = vadd.xlane.f32.xlu0 %v24
  %v28 = vpop.xlane.xlu0 %27
  %29 = vadd.xlane.f32.xlu0 %v26
  %v30 = vpop.xlane.xlu0 %29
  %v31 = vlog2.pop %v28
  %v32 = vmul.f32 %v31, 0.6931472
  %v33 = vlog2.pop %v30
  %v34 = vmul.f32 %v33, 0.6931472
  %v35 = vadd.f32 %v32, %v18
  %v36 = vadd.f32 %v34, %v20
  %v37 = vlaneseq
  %v38 = vand.u32 %v37, 127
  %39 = vset.pattern.permute.xlu0 0
  %40 = vperm.xlu0 %39, %v15
  %v41 = vpop.permute.xlu0 %40
  %42 = vset.pattern.permute.xlu0 0
  %43 = vperm.xlu0 %42, %v16
  %v44 = vpop.permute.xlu0 %43
  %vm45 = vcmp.eq.s32.totalorder %v38, %v41
  %vm46 = vcmp.eq.s32.totalorder %v38, %v44
  %v47 = vsel %vm45, %v13, 0.0
  %v48 = vsel %vm46, %v14, 0.0
  %49 = vadd.xlane.f32.xlu0 %v47
  %v50 = vpop.xlane.xlu0 %49
  %51 = vadd.xlane.f32.xlu0 %v48
  %v52 = vpop.xlane.xlu0 %51
  %53 = vadd.xlane.f32.xlu0 %v13
  %v54 = vpop.xlane.xlu0 %53
  %55 = vadd.xlane.f32.xlu0 %v14
  %v56 = vpop.xlane.xlu0 %55
  %v57 = vmul.f32 %v35, 128.0
  %v58 = vmul.f32 %v36, 128.0
  %v59 = vsub.f32 %v57, %v54
  %v60 = vsub.f32 %v58, %v56
  %v61 = vmul.f32 %v59, 0.0007874016
  %v62 = vmul.f32 %v60, 0.0007874016
  %v63 = vadd.f32 %v61, -0.8095017
  %v64 = vadd.f32 %v62, -0.8095017
  %v65 = vsub.f32 %v50, %v35
  %v66 = vsub.f32 %v52, %v36
  %v67 = vmul.f32 %v65, 0.8992126
  %v68 = vmul.f32 %v66, 0.8992126
  %v69 = vsub.f32 %v63, %v67
  %v70 = vsub.f32 %v64, %v68
  %s71 = smul.u32 0, 16
  %v72 = vlaneseq
  %v73 = vshrl.u32 %v72, 7
  %v74 = vadd.s32 %v73, 8
  %v75 = vstv %s71
  %v76 = vadd.s32 %v75, %v73
  %v77 = vadd.s32 %v75, %v74
  %vm78 = vcmp.lt.s32.totalorder %v76, 16
  %vm79 = vcmp.lt.s32.totalorder %v77, 16
  %v80 = vsel %vm78, %v69, 0.0
  %v81 = vsel %vm79, %v70, 0.0
  %vm82 = vcmask 7168
  %83 = vst.msk [vmem:[%s2] sm:$0xff] %vm82, %v80
  %84 = vst.msk [vmem:[%s2 + $0x8] sm:$0xff] %vm82, %v81
  // Predicated region
  $region10: #{tpu_custom_call.1} parent=0 // pred_check
    _
  $region11: #{tpu_custom_call.1} parent=0 // pred_check_branch
    %86 = sbr.rel (0) target = $region13
  $region12: #{tpu_custom_call.1} parent=0 // pred_region
    _
  $region13: #{tpu_custom_call.1} parent=0 // pred_fallthru
    _
  // Predicated region
  $region14: #{tpu_custom_call.1} parent=0 // pred_check
    _
  $region15: #{tpu_custom_call.1} parent=0 // pred_check_branch
    %88 = sbr.rel (0) target = $region17
  $region16: #{tpu_custom_call.1} parent=0 // pred_region
    _
  $region17: #{tpu_custom_call.1} parent=0 // pred_fallthru
    _

</llo_original>
